<compile_context>
chip_gen: v7x
topology: tpu7x:2x2x1
jax: 0.10.0
libtpu: 0.0.40
codegen_flags: <defaults>
</compile_context>

<pallas_src>
import functools
import math

import jax
import jax.numpy as jnp
from jax.experimental import pallas as pl
from jax.experimental.pallas import tpu as pltpu


def _gece_kernel(pred_ref, labels_ref, out_ref, *, q, n, tile_n):
    # pred_ref:   [C, TN] logits (classes on sublanes, batch on lanes)
    # labels_ref: [1, TN] int32 class ids
    # out_ref:    [8, 128] per-tile partial sum of (1 - Yg**q), broadcast
    logits = pred_ref[...].astype(jnp.float32)                      # [C, TN]

    # Numerically stable softmax pieces over the class (sublane) axis.
    m = jnp.max(logits, axis=0, keepdims=True)                      # [1, TN]
    shifted = logits - m                                            # [C, TN]
    denom = jnp.sum(jnp.exp(shifted), axis=0, keepdims=True)        # [1, TN]

    # Gather the label's shifted logit via compare-and-select over classes.
    cls = jax.lax.broadcasted_iota(jnp.int32, logits.shape, 0)      # [C, TN]
    gathered = jnp.sum(jnp.where(cls == labels_ref[...], shifted, 0.0),
                       axis=0, keepdims=True)                       # [1, TN]

    # Log-space: log_yg = log softmax[label]; clamp matches clamp(p, 1e-7, 1.0).
    log_yg = jnp.clip(gathered - jnp.log(denom), math.log(1e-7), 0.0)
    lq = 1.0 - jnp.exp(jnp.float32(q) * log_yg)                     # [1, TN]

    # Mask lanes past the true batch (ragged last tile reads unspecified data;
    # all ops above are lane-local, so garbage stays in masked lanes).
    start = pl.program_id(0) * tile_n
    lane = jax.lax.broadcasted_iota(jnp.int32, (1, tile_n), 1)
    lq = jnp.where(start + lane < n, lq, 0.0)

    partial = jnp.sum(lq, axis=1, keepdims=True)                    # [1, 1]
    out_ref[...] = jnp.broadcast_to(partial, (8, 128))


def gece_loss_pallas(preds, labels, *, q=0.7, tile_n=65536):
    """preds: [N, C] float logits, labels: [N] int. Returns scalar f32 GCE loss."""
    n, c = preds.shape

    # TODO(synk): ideally the producer emits logits already as [C, N]
    # (e.g. compute the final projection as W @ x.T); this transpose is an
    # extra read+write of the N*C logits in HBM on top of the kernel's own pass.
    pred_t = jnp.transpose(preds)                                   # [C, N]
    labels2d = labels.astype(jnp.int32).reshape(1, n)               # [1, N]

    # Tile selection: multiples of 128 lanes, multi-MB blocks, and at least two
    # tiles for non-trivial batches so both v7x TensorCores get fed.
    if n <= tile_n:
        if n > 8192:
            tile_n = ((((n + 1) // 2) + 127) // 128) * 128
        else:
            tile_n = n           # single block; full-dim blocks are always legal
    else:
        tile_n = max(128, (tile_n // 128) * 128)
    num_tiles = (n + tile_n - 1) // tile_n

    cost = pl.CostEstimate(
        flops=8 * n * c,
        transcendentals=n * (c + 2),
        bytes_accessed=n * (4 * c + 4) + num_tiles * 8 * 128 * 4,
    )

    partials = pl.pallas_call(
        functools.partial(_gece_kernel, q=q, n=n, tile_n=tile_n),
        out_shape=jax.ShapeDtypeStruct((num_tiles * 8, 128), jnp.float32),
        grid_spec=pltpu.PrefetchScalarGridSpec(
            num_scalar_prefetch=0,
            grid=(num_tiles,),
            in_specs=[
                pl.BlockSpec((c, tile_n), lambda i: (0, i)),   # logits tile
                pl.BlockSpec((1, tile_n), lambda i: (0, i)),   # labels tile
            ],
            out_specs=pl.BlockSpec((8, 128), lambda i: (i, 0)),
        ),
        compiler_params=pltpu.CompilerParams(
            dimension_semantics=("parallel",),      # independent tiles -> both TCs on v7x
            vmem_limit_bytes=32 * 1024 * 1024,
        ),
        cost_estimate=cost,
    )(pred_t, labels2d)

    # Tiny epilogue: sum num_tiles scalars, apply mean and 1/log(1+q).
    total = jnp.sum(partials.reshape(num_tiles, 8, 128)[:, 0, 0])
    return total / (n * math.log(1.0 + q))


def gece_loss_ref(preds, labels, *, q=0.7):
    p = jnp.clip(jax.nn.softmax(preds.astype(jnp.float32), axis=1), 1e-7, 1.0)
    yg = jnp.take_along_axis(p, labels.astype(jnp.int32)[:, None], axis=1)
    lq = (1.0 - yg ** q) / math.log(1.0 + q)
    return jnp.mean(lq)


if __name__ == "__main__":
    key = jax.random.PRNGKey(0)
    k1, k2, k3, k4 = jax.random.split(key, 4)

    Q = 0.7

    # Small case (single tile).
    N, C = 16, 10
    preds = jax.random.normal(k1, (N, C), dtype=jnp.float32)
    labels = jax.random.randint(k2, (N,), 0, C, dtype=jnp.int32)
    out = jax.block_until_ready(gece_loss_pallas(preds, labels, q=Q))
    ref = gece_loss_ref(preds, labels, q=Q)
    assert jnp.allclose(out, ref, rtol=1e-5, atol=1e-5), (out, ref)

    # Larger case exercising the multi-tile grid and ragged-last-tile masking.
    N2, C2 = 9000, 10
    preds2 = jax.random.normal(k3, (N2, C2), dtype=jnp.float32)
    labels2 = jax.random.randint(k4, (N2,), 0, C2, dtype=jnp.int32)
    out2 = jax.block_until_ready(gece_loss_pallas(preds2, labels2, q=Q))
    ref2 = gece_loss_ref(preds2, labels2, q=Q)
    assert jnp.allclose(out2, ref2, rtol=1e-4, atol=1e-5), (out2, ref2)

    print("KERNEL_OK")
</pallas_src>

<mosaic_0001>
module attributes {stable_mosaic.version = 11 : i64} {
  func.func @_gece_kernel(%arg0: i32, %arg1: memref<10x16xf32, #tpu.memory_space<vmem>>, %arg2: memref<1x16xi32, #tpu.memory_space<vmem>>, %arg3: memref<8x128xf32, #tpu.memory_space<vmem>>) attributes {dimension_semantics = [#tpu.dimension_semantics<parallel>], iteration_bounds = array<i64: 1>, scalar_prefetch = 0 : i64, scratch_operands = 0 : i64, tpu.core_type = #tpu.core_type<tc>, window_params = [{transform_indices = @transform_0, window_bounds = array<i64: 10, 16>}, {transform_indices = @transform_1, window_bounds = array<i64: 1, 16>}, {transform_indices = @transform_2, window_bounds = array<i64: 8, 128>}]} {
    %c0 = arith.constant 0 : index
    %c0_0 = arith.constant 0 : index
    %0 = vector.load %arg1[%c0, %c0_0] : memref<10x16xf32, #tpu.memory_space<vmem>>, vector<10x16xf32>
    %cst = arith.constant dense<0xFF800000> : vector<16xf32>
    %1 = vector.multi_reduction <maximumf>, %0, %cst [0] : vector<10x16xf32> to vector<16xf32>
    %2 = vector.shape_cast %1 : vector<16xf32> to vector<1x16xf32>
    %3 = vector.broadcast %2 : vector<1x16xf32> to vector<10x16xf32>
    %4 = arith.subf %0, %3 : vector<10x16xf32>
    %5 = math.exp %4 : vector<10x16xf32>
    %cst_1 = arith.constant dense<0.000000e+00> : vector<16xf32>
    %6 = vector.multi_reduction <add>, %5, %cst_1 [0] : vector<10x16xf32> to vector<16xf32>
    %7 = vector.shape_cast %6 : vector<16xf32> to vector<1x16xf32>
    %8 = tpu.iota {dimensions = array<i32: 0>} : vector<10x16xi32>
    %c0_2 = arith.constant 0 : index
    %c0_3 = arith.constant 0 : index
    %9 = vector.load %arg2[%c0_2, %c0_3] : memref<1x16xi32, #tpu.memory_space<vmem>>, vector<1x16xi32>
    %10 = vector.broadcast %9 : vector<1x16xi32> to vector<10x16xi32>
    %11 = arith.cmpi eq, %8, %10 : vector<10x16xi32>
    %cst_4 = arith.constant 0.000000e+00 : f32
    %12 = vector.broadcast %cst_4 : f32 to vector<10x16xf32>
    %13 = arith.select %11, %4, %12 : vector<10x16xi1>, vector<10x16xf32>
    %cst_5 = arith.constant dense<0.000000e+00> : vector<16xf32>
    %14 = vector.multi_reduction <add>, %13, %cst_5 [0] : vector<10x16xf32> to vector<16xf32>
    %15 = vector.shape_cast %14 : vector<16xf32> to vector<1x16xf32>
    %16 = math.log %7 : vector<1x16xf32>
    %17 = arith.subf %15, %16 : vector<1x16xf32>
    %cst_6 = arith.constant -16.1180954 : f32
    %cst_7 = arith.constant 0.000000e+00 : f32
    %18 = vector.broadcast %cst_6 : f32 to vector<1x16xf32>
    %19 = arith.maximumf %18, %17 : vector<1x16xf32>
    %20 = vector.broadcast %cst_7 : f32 to vector<1x16xf32>
    %21 = arith.minimumf %20, %19 : vector<1x16xf32>
    %cst_8 = arith.constant 0.699999988 : f32
    %22 = vector.broadcast %cst_8 : f32 to vector<1x16xf32>
    %23 = arith.mulf %22, %21 : vector<1x16xf32>
    %24 = math.exp %23 : vector<1x16xf32>
    %cst_9 = arith.constant 1.000000e+00 : f32
    %25 = vector.broadcast %cst_9 : f32 to vector<1x16xf32>
    %26 = arith.subf %25, %24 : vector<1x16xf32>
    %c16_i32 = arith.constant 16 : i32
    %27 = arith.muli %arg0, %c16_i32 : i32
    %28 = tpu.iota {dimensions = array<i32: 1>} : vector<1x16xi32>
    %29 = vector.broadcast %27 : i32 to vector<1x16xi32>
    %30 = arith.addi %29, %28 : vector<1x16xi32>
    %c16_i32_10 = arith.constant 16 : i32
    %31 = vector.broadcast %c16_i32_10 : i32 to vector<1x16xi32>
    %32 = arith.cmpi slt, %30, %31 : vector<1x16xi32>
    %cst_11 = arith.constant 0.000000e+00 : f32
    %33 = vector.broadcast %cst_11 : f32 to vector<1x16xf32>
    %34 = arith.select %32, %26, %33 : vector<1x16xi1>, vector<1x16xf32>
    %cst_12 = arith.constant dense<0.000000e+00> : vector<1xf32>
    %35 = vector.multi_reduction <add>, %34, %cst_12 [1] : vector<1x16xf32> to vector<1xf32>
    %36 = vector.shape_cast %35 : vector<1xf32> to vector<1x1xf32>
    %37 = vector.shape_cast %36 : vector<1x1xf32> to vector<1x1xf32>
    %38 = vector.broadcast %37 : vector<1x1xf32> to vector<8x128xf32>
    %c0_13 = arith.constant 0 : index
    %c0_14 = arith.constant 0 : index
    %39 = vector.load %arg3[%c0_13, %c0_14] : memref<8x128xf32, #tpu.memory_space<vmem>>, vector<8x128xf32>
    tpu.vector_store %arg3[%c0_13, %c0_14], %38 {strides = array<i32>} : memref<8x128xf32, #tpu.memory_space<vmem>>, vector<8x128xf32>,
    return
  }
  func.func @transform_0(%arg0: i32) -> (i32, i32) {
    %c0_i32 = arith.constant 0 : i32
    %c0_i32_0 = arith.constant 0 : i32
    return %c0_i32, %arg0 : i32, i32
  }
  func.func @transform_1(%arg0: i32) -> (i32, i32) {
    %c0_i32 = arith.constant 0 : i32
    %c0_i32_0 = arith.constant 0 : i32
    return %c0_i32, %arg0 : i32, i32
  }
  func.func @transform_2(%arg0: i32) -> (i32, i32) {
    %c0_i32 = arith.constant 0 : i32
    %c0_i32_0 = arith.constant 0 : i32
    return %arg0, %c0_i32 : i32, i32
  }
}

</mosaic_0001>

<llo_original>
// kernel: tpu_custom_call.1
$region0: #{tpu_custom_call.1}
  #allocation0 [shape = 'u32[]', space=smem, size = 0x4, offset = 0x4, fixed_abs, tag = 'smem constant byte address 0x4 - core index']
  #allocation1 [shape = 'u32[144,128]{1,0:T(1,128)}', space=vmem, size = 0x12000, scoped, tag = 'internal scratch']
  %s0 = inlined_call_operand.hbm [shape: f32[10,16], index: 0, kind: input, shape index: {}]
  %s1 = inlined_call_operand.vmem [shape: s32[1,16], index: 1, kind: input, shape index: {}]
  %s2 = inlined_call_operand.hbm [shape: f32[8,128], index: 2, kind: output, shape index: {}]
  %s3 = sld [smem:[#allocation0]]
  $region22: #{tpu_custom_call.1} parent=0
    _
  %s5 = ssub.s32 1, %s3
  %s6 = scalar_select 0, %s5, %s3
  $region1: #{tpu_custom_call.1} parent=0
    #allocation2 [shape = 'u8[8192]{0}', space=vmem, size = 0x2000, scoped, tag = 'input window, operand 0, single buffered']
    #allocation3 [shape = 's32[1]{0}', space=sflag, size = 0x4, scoped, tag = 'scoped memory for tpu_custom_call.1']
    #allocation4 [shape = 's32[1]{0}', space=sflag, size = 0x4, scoped, tag = 'scoped memory for tpu_custom_call.1']
    #allocation5 [shape = 'u8[4096]{0}', space=vmem, size = 0x1000, scoped, tag = 'output window, operand 0, single buffered']
    %7 = vsyncpa [#allocation3], 0
    %8 = vsyncpa [#allocation4], 0
    // Predicated region
    $region2: #{tpu_custom_call.1} parent=1 // pred_check
      _
    $region3: #{tpu_custom_call.1} parent=1 // pred_check_branch
      %10 = sbr.rel (0) target = $region5
    $region4: #{tpu_custom_call.1} parent=1 // pred_region
      %s12 = ssub.s32 256, 256
      %13 = vsyncadd [#allocation3], %s12
      %s14 = sshll.u32 [#allocation2], 4
      %s15 = int_to_ptr.vmem [resolvable:$true] %s14
      %20 = dma.hbm_to_vmem [thread:$0]  %s0, 256, %s15, [#allocation3], 128, 128, 8
    $region5: #{tpu_custom_call.1} parent=1 // pred_fallthru
      _
    // Predicated region
    $region6: #{tpu_custom_call.1} parent=1 // pred_check
      _
    $region7: #{tpu_custom_call.1} parent=1 // pred_check_branch
      %22 = sbr.rel (0) target = $region9
    $region8: #{tpu_custom_call.1} parent=1 // pred_region
      _
    $region9: #{tpu_custom_call.1} parent=1 // pred_fallthru
      _
    // Predicated region
    $region10: #{tpu_custom_call.1} parent=1 // pred_check
      _
    $region11: #{tpu_custom_call.1} parent=1 // pred_check_branch
      %24 = sbr.rel (0) target = $region13
    $region12: #{tpu_custom_call.1} parent=1 // pred_region
      %25 = dma.done [#allocation3], 256
    $region13: #{tpu_custom_call.1} parent=1 // pred_fallthru
      _
    %v26 = vld [vmem:[#allocation2] sm:$0xff]
    %v27 = vld [vmem:[#allocation2 + $0x8] sm:$0x3]
    %vm28 = vcmask 130048
    %v29 = vsel %vm28, %v26, -inf
    %vm30 = vcmask 123904
    %v31 = vsel %vm30, %v27, -inf
    %v32 = vmax.f32 %v29, %v31
    %v33 = vrot.slane %v32, 4
    %v34 = vmax.f32 %v32, %v33
    %v35 = vrot.slane %v34, 2
    %v36 = vmax.f32 %v34, %v35
    %v37 = vrot.slane %v36, 1
    %v38 = vmax.f32 %v36, %v37
    %v39 = vsub.f32 %v26, %v38
    %v40 = vsub.f32 %v27, %v38
    %v41 = vmul.f32 %v39, 1.442695
    %v42 = vpow.pop %v41
    %v43 = vmul.f32 %v40, 1.442695
    %v44 = vpow.pop %v43
    %v45 = vsel %vm28, %v42, 0.0
    %v46 = vsel %vm30, %v44, 0.0
    %v47 = vadd.f32 %v45, %v46
    %v48 = vrot.slane %v47, 4
    %v49 = vadd.f32 %v47, %v48
    %v50 = vrot.slane %v49, 2
    %v51 = vadd.f32 %v49, %v50
    %v52 = vrot.slane %v51, 1
    %v53 = vadd.f32 %v51, %v52
    %v54 = vlaneseq
    %v55 = vshrl.u32 %v54, 7
    %v56 = vadd.s32 %v55, 8
    %v57 = vld [vmem:[%s1] sm:$0x1]
    %v58 = vlaneseq
    %v59 = vshrl.u32 %v58, 7
    %v60 = vsub.s32 0, %v59
    %v61 = vrot.slane %v57, %v60
    %vm62 = vcmp.eq.s32.totalorder %v55, %v61
    %vm63 = vcmp.eq.s32.totalorder %v56, %v61
    %v64 = vsel %vm62, %v39, 0.0
    %v65 = vsel %vm63, %v40, 0.0
    %v66 = vsel %vm28, %v64, 0.0
    %v67 = vsel %vm30, %v65, 0.0
    %v68 = vadd.f32 %v66, %v67
    %v69 = vrot.slane %v68, 4
    %v70 = vadd.f32 %v68, %v69
    %v71 = vrot.slane %v70, 2
    %v72 = vadd.f32 %v70, %v71
    %v73 = vrot.slane %v72, 1
    %v74 = vadd.f32 %v72, %v73
    %v75 = vlog2.pop %v53
    %v76 = vmul.f32 %v75, 0.6931472
    %v77 = vsub.f32 %v74, %v76
    %v78 = vmax.f32 %v77, -16.118095
    %v79 = vmin.f32 %v78, 0.0
    %v80 = vmul.f32 %v79, 0.7
    %v81 = vmul.f32 %v80, 1.442695
    %v82 = vpow.pop %v81
    %v83 = vsub.f32 1.0, %v82
    %s84 = smul.u32 0, 16
    %v85 = vlaneseq
    %v86 = vand.u32 %v85, 127
    %v87 = vstv %s84
    %v88 = vadd.s32 %v87, %v86
    %vm89 = vcmp.lt.s32.totalorder %v88, 16
    %v90 = vsel %vm89, %v83, 0.0
    %v91 = vsel %vm28, %v90, 0.0
    %92 = vadd.xlane.f32.xlu0 %v91
    %v93 = vpop.xlane.xlu0 %92
    %94 = vst [vmem:[#allocation5] sm:$0xff] %v93
    // Predicated region
    $region14: #{tpu_custom_call.1} parent=1 // pred_check
      _
    $region15: #{tpu_custom_call.1} parent=1 // pred_check_branch
      %96 = sbr.rel (0) target = $region17
    $region16: #{tpu_custom_call.1} parent=1 // pred_region
      %s98 = ssub.s32 128, 128
      %99 = vsyncadd [#allocation4], %s98
      %s101 = sshll.u32 [#allocation5], 4
      %s102 = int_to_ptr.vmem [resolvable:$true] %s101
      %104 = dma.vmem_to_hbm [thread:$0]  %s102, 128, %s2, [#allocation4]
    $region17: #{tpu_custom_call.1} parent=1 // pred_fallthru
      _
    // Predicated region
    $region18: #{tpu_custom_call.1} parent=1 // pred_check
      _
    $region19: #{tpu_custom_call.1} parent=1 // pred_check_branch
      %106 = sbr.rel (0) target = $region21
    $region20: #{tpu_custom_call.1} parent=1 // pred_region
      %107 = dma.done [#allocation4], 128
    $region21: #{tpu_custom_call.1} parent=1 // pred_fallthru
      _
    %108 = vsyncpa [#allocation3], 1
    %109 = vsyncpa [#allocation4], 1

</llo_original>
